<compile_context>
chip_gen: v7x
topology: tpu7x:2x2x1
jax: 0.10.0
libtpu: 0.0.40
codegen_flags: <defaults>
</compile_context>

<pallas_src>
import jax
import jax.numpy as jnp
from jax.experimental import pallas as pl
from jax.experimental.pallas import tpu as pltpu


def _copy_kernel(lik_ref, out_ref):
    # Identity forward: per-tile VMEM copy.
    out_ref[...] = lik_ref[...]


def _sublane_align(dtype) -> int:
    # Sub-32-bit dtypes pack along sublanes: bf16 wants x16, int8/fp8 want x32.
    itemsize = jnp.dtype(dtype).itemsize
    return {4: 8, 2: 16, 1: 32}.get(itemsize, 8)


def _per_buffer_tile_bytes() -> int:
    # Per-generation per-buffer tile budget (2 in + 2 out double buffers).
    #   v6e : 128 MiB VMEM -> 8 MiB tiles (raise scoped limit past 32 MiB).
    #   v5e : 0.82 TB/s HBM already amortizes step overhead at ~4 MiB tiles.
    #   v7x / unknown: 64 MiB VMEM, 32 MiB scoped default -> cap at 4 MiB.
    try:
        kind = jax.devices()[0].device_kind.lower()
    except Exception:  # pragma: no cover - defensive, e.g. AOT on CPU
        kind = ""
    if "v6" in kind:
        return 8 << 20
    return 4 << 20


def _copy_2d(x: jax.Array, tile_budget: int) -> jax.Array:
    B, T = x.shape
    itemsize = jnp.dtype(x.dtype).itemsize
    sub = _sublane_align(x.dtype)

    # Lane tile: prefer the full lane extent (every block is one contiguous
    # HBM region -> single dense DMA, fewer grid steps).  Only split the lane
    # dim, in 128-multiples, when even a sub-aligned row-slab overflows the
    # per-buffer budget.
    if T * itemsize * sub <= tile_budget:
        TT = T
    else:
        TT = max(128, (tile_budget // (sub * itemsize)) // 128 * 128)

    rows_budget = max(sub, tile_budget // (TT * itemsize))
    TB = (rows_budget // sub) * sub
    if TB >= B:
        TB = B  # full extent (any value legal when equal to the array dim)

    # Megacore (v7x: 2 TCs): make sure the 'parallel' grid has >=2 blocks on
    # large inputs so one core doesn't sit idle.  Harmless elsewhere.
    if TB == B and TT == T and B >= 2 * sub and B * T * itemsize >= (2 << 20):
        TB = max(sub, ((B // 2) // sub) * sub)

    grid = (pl.cdiv(B, TB), pl.cdiv(T, TT))

    # 2 in + 2 out double-buffers plus headroom; never below the 32 MiB
    # scoped default (only ever raise, never shrink compiler buffering).
    tile_bytes = TB * TT * itemsize
    vmem_limit = max(4 * tile_bytes + (2 << 20), 32 << 20)

    return pl.pallas_call(
        _copy_kernel,
        out_shape=jax.ShapeDtypeStruct(x.shape, x.dtype),
        grid=grid,
        in_specs=[pl.BlockSpec((TB, TT), lambda i, j: (i, j))],
        out_specs=pl.BlockSpec((TB, TT), lambda i, j: (i, j)),
        compiler_params=pltpu.CompilerParams(
            dimension_semantics=("parallel", "parallel"),
            vmem_limit_bytes=vmem_limit,
        ),
    )(x)


def log_likelihood_factors(likelihood: jax.Array, *, use_kernel: bool = True,
                           donate: bool = False) -> jax.Array:
    """Pallas implementation of LogLikelihoodFactors.forward (identity).

    use_kernel=False : true pass-through, zero HBM traffic (preferred).
    donate=True      : output is allowed to alias the input; the identity's
                       alias is the result, so no kernel runs and no HBM
                       bytes move (aliasing inside a copy kernel would NOT
                       save the 2N bytes of traffic, only the allocation).
    otherwise        : lane-dense tiled copy materializing a fresh buffer.
    """
    if (not use_kernel) or donate or likelihood.ndim == 0 or likelihood.size == 0:
        return likelihood

    shape = likelihood.shape
    n = likelihood.size
    itemsize = jnp.dtype(likelihood.dtype).itemsize
    sub = _sublane_align(likelihood.dtype)
    budget = _per_buffer_tile_bytes()

    if n % 128 == 0:
        # Flatten the contiguous array into a lane-dense (rows, L) slab with
        # L a multiple of 128: unmasked dense stores even when the trailing
        # time dim is small or not 128-aligned.
        L = 128
        while (n % (2 * L) == 0
               and 2 * L * itemsize * sub <= budget
               and L < 16384):
            L *= 2
        x2d = likelihood.reshape(n // L, L)
    elif likelihood.ndim >= 2:
        # Unaligned total size: fall back to (batch*, time); full-extent or
        # 128-multiple lane tiles handled inside _copy_2d.
        x2d = likelihood.reshape(-1, shape[-1])
    else:
        x2d = likelihood.reshape(1, n)

    out = _copy_2d(x2d, budget)
    return out.reshape(shape)


if __name__ == "__main__":
    # LogLikelihoodFactors has no parameters.  likelihood: per-time-step
    # log-likelihood factors, e.g. (batch, time).
    key = jax.random.PRNGKey(0)
    k1, k2, k3 = jax.random.split(key, 3)

    # Small, unaligned time dim -> fallback full-extent blocks.
    lik_small = jax.random.normal(k1, (2, 8), dtype=jnp.float32)
    out_small = jax.block_until_ready(log_likelihood_factors(lik_small))
    assert out_small.shape == lik_small.shape
    assert out_small.dtype == lik_small.dtype
    assert bool(jnp.all(out_small == lik_small))

    # 128-aligned total size -> lane-dense flattened copy path.
    lik_aligned = jax.random.normal(k2, (8, 256), dtype=jnp.float32)
    out_aligned = jax.block_until_ready(log_likelihood_factors(lik_aligned))
    assert out_aligned.shape == lik_aligned.shape
    assert bool(jnp.all(out_aligned == lik_aligned))

    # 3-D input in bf16 (exercises flatten + sublane packing alignment).
    lik_3d = jax.random.normal(k3, (2, 3, 64), dtype=jnp.bfloat16)
    out_3d = jax.block_until_ready(log_likelihood_factors(lik_3d))
    assert out_3d.shape == lik_3d.shape
    assert out_3d.dtype == lik_3d.dtype
    assert bool(jnp.all(out_3d == lik_3d))

    # Zero-cost paths: plain pass-through (no kernel, zero HBM traffic).
    assert log_likelihood_factors(lik_small, use_kernel=False) is lik_small
    assert log_likelihood_factors(lik_small, donate=True) is lik_small

    print("KERNEL_OK")
</pallas_src>

<mosaic_0001>
module attributes {stable_mosaic.version = 11 : i64} {
  func.func @_copy_kernel(%arg0: i32, %arg1: i32, %arg2: memref<2x8xf32, #tpu.memory_space<vmem>>, %arg3: memref<2x8xf32, #tpu.memory_space<vmem>>) attributes {dimension_semantics = [#tpu.dimension_semantics<parallel>, #tpu.dimension_semantics<parallel>], iteration_bounds = array<i64: 1, 1>, scalar_prefetch = 0 : i64, scratch_operands = 0 : i64, tpu.core_type = #tpu.core_type<tc>, window_params = [{transform_indices = @transform_0, window_bounds = array<i64: 2, 8>}, {transform_indices = @transform_1, window_bounds = array<i64: 2, 8>}]} {
    %c0 = arith.constant 0 : index
    %c0_0 = arith.constant 0 : index
    %0 = vector.load %arg2[%c0, %c0_0] : memref<2x8xf32, #tpu.memory_space<vmem>>, vector<2x8xf32>
    %c0_1 = arith.constant 0 : index
    %c0_2 = arith.constant 0 : index
    %1 = vector.load %arg3[%c0_1, %c0_2] : memref<2x8xf32, #tpu.memory_space<vmem>>, vector<2x8xf32>
    tpu.vector_store %arg3[%c0_1, %c0_2], %0 {strides = array<i32>} : memref<2x8xf32, #tpu.memory_space<vmem>>, vector<2x8xf32>,
    return
  }
  func.func @transform_0(%arg0: i32, %arg1: i32) -> (i32, i32) {
    %c0_i32 = arith.constant 0 : i32
    return %arg0, %arg1 : i32, i32
  }
  func.func @transform_1(%arg0: i32, %arg1: i32) -> (i32, i32) {
    %c0_i32 = arith.constant 0 : i32
    return %arg0, %arg1 : i32, i32
  }
}

</mosaic_0001>

<llo_original>
// kernel: tpu_custom_call.1
$region0: #{tpu_custom_call.1}
  #allocation0 [shape = 'u32[]', space=smem, size = 0x4, offset = 0x4, fixed_abs, tag = 'smem constant byte address 0x4 - core index']
  #allocation1 [shape = 'u32[144,128]{1,0:T(1,128)}', space=vmem, size = 0x12000, scoped, tag = 'internal scratch']
  %s0 = inlined_call_operand.hbm [shape: f32[2,8], index: 0, kind: input, shape index: {}]
  %s1 = inlined_call_operand.hbm [shape: f32[2,8], index: 1, kind: output, shape index: {}]
  %s2 = sld [smem:[#allocation0]]
  $region18: #{tpu_custom_call.1} parent=0
    _
  %s4 = ssub.s32 1, %s2
  %s5 = scalar_select 0, %s4, %s2
  $region1: #{tpu_custom_call.1} parent=0
    #allocation2 [shape = 'u8[1024]{0}', space=vmem, size = 0x400, scoped, tag = 'input window, operand 0, single buffered']
    #allocation3 [shape = 's32[1]{0}', space=sflag, size = 0x4, scoped, tag = 'scoped memory for tpu_custom_call.1']
    #allocation4 [shape = 's32[1]{0}', space=sflag, size = 0x4, scoped, tag = 'scoped memory for tpu_custom_call.1']
    #allocation5 [shape = 'u8[1024]{0}', space=vmem, size = 0x400, scoped, tag = 'output window, operand 0, single buffered']
    %6 = vsyncpa [#allocation3], 0
    %7 = vsyncpa [#allocation4], 0
    // Predicated region
    $region2: #{tpu_custom_call.1} parent=1 // pred_check
      _
    $region3: #{tpu_custom_call.1} parent=1 // pred_check_branch
      %9 = sbr.rel (0) target = $region5
    $region4: #{tpu_custom_call.1} parent=1 // pred_region
      %s11 = ssub.s32 32, 32
      %12 = vsyncadd [#allocation3], %s11
      %s14 = sshll.u32 [#allocation2], 4
      %s15 = int_to_ptr.vmem [resolvable:$true] %s14
      %17 = dma.hbm_to_vmem [thread:$0]  %s0, 32, %s15, [#allocation3]
    $region5: #{tpu_custom_call.1} parent=1 // pred_fallthru
      _
    // Predicated region
    $region6: #{tpu_custom_call.1} parent=1 // pred_check
      _
    $region7: #{tpu_custom_call.1} parent=1 // pred_check_branch
      %19 = sbr.rel (0) target = $region9
    $region8: #{tpu_custom_call.1} parent=1 // pred_region
      %20 = dma.done [#allocation3], 32
    $region9: #{tpu_custom_call.1} parent=1 // pred_fallthru
      _
    %v21 = vld [vmem:[#allocation2] sm:$0x3]
    %vm22 = vcmask 58368
    %23 = vst.msk [vmem:[#allocation5] sm:$0x3] %vm22, %v21
    // Predicated region
    $region10: #{tpu_custom_call.1} parent=1 // pred_check
      _
    $region11: #{tpu_custom_call.1} parent=1 // pred_check_branch
      %25 = sbr.rel (0) target = $region13
    $region12: #{tpu_custom_call.1} parent=1 // pred_region
      %s27 = ssub.s32 32, 32
      %28 = vsyncadd [#allocation4], %s27
      %s30 = sshll.u32 [#allocation5], 4
      %s31 = int_to_ptr.vmem [resolvable:$true] %s30
      %33 = dma.vmem_to_hbm [thread:$0]  %s31, 32, %s1, [#allocation4]
    $region13: #{tpu_custom_call.1} parent=1 // pred_fallthru
      _
    // Predicated region
    $region14: #{tpu_custom_call.1} parent=1 // pred_check
      _
    $region15: #{tpu_custom_call.1} parent=1 // pred_check_branch
      %35 = sbr.rel (0) target = $region17
    $region16: #{tpu_custom_call.1} parent=1 // pred_region
      %36 = dma.done [#allocation4], 32
    $region17: #{tpu_custom_call.1} parent=1 // pred_fallthru
      _
    %37 = vsyncpa [#allocation3], 1
    %38 = vsyncpa [#allocation4], 1

</llo_original>
